<compile_context>
chip_gen: v7x
topology: tpu7x:2x2x1
jax: 0.10.0
libtpu: 0.0.40
codegen_flags: <defaults>
</compile_context>

<pallas_src>
import functools

import jax
import jax.numpy as jnp
from jax.experimental import pallas as pl
from jax.experimental.pallas import tpu as pltpu

HIDDEN = 256


def _critic_kernel(x_ref, w1_ref, w2_ref, vecs_ref, o_ref, *, compute_dtype):
    # x_ref   : (TB, state_dim)  streamed f32 batch tile (original layout)
    # w1_ref  : (256, state_dim) resident, pre-cast to compute_dtype
    # w2_ref  : (256, 256)       resident, pre-cast to compute_dtype
    # vecs_ref: (256, 4) f32     packed [b1 | b2 | w3 | b3(broadcast)]
    # o_ref   : (1, TB)          lane-dense value row
    vecs = vecs_ref[...]
    b1 = vecs[:, 0:1]
    b2 = vecs[:, 1:2]
    w3 = vecs[:, 2:3]
    b3 = vecs[0:1, 3:4]

    # Streamed tile: cast here (cheap: state_dim*TB elems). Weights were cast
    # once in the wrapper so no per-step cast of resident operands.
    x = x_ref[...].astype(compute_dtype)

    # Layer 1 on the MXU, contracting state_dim of both operands:
    #   (256, D) . (TB, D)^T -> (256, TB)   (batch lands on the lane axis)
    h1 = jax.lax.dot_general(
        w1_ref[...], x, (((1,), (1,)), ((), ())),
        preferred_element_type=jnp.float32)
    h1 = jnp.maximum(h1 + b1, 0.0)

    # Layer 2: (256, 256) @ (256, TB) -> (256, TB), f32 accumulation.
    h2 = jnp.dot(w2_ref[...], h1.astype(compute_dtype),
                 preferred_element_type=jnp.float32)
    h2 = jnp.maximum(h2 + b2, 0.0)

    # Value head (N=1): VPU multiply + sublane reduction (XLU slot is idle)
    # instead of a wasteful single-column MXU matmul; lane-dense (1, TB) out.
    out = jnp.sum(h2 * w3, axis=0, keepdims=True) + b3
    o_ref[...] = out.astype(o_ref.dtype)


def _auto_block_b(batch, state_dim, desired=2048):
    """Pick a batch tile: big enough to amortize ~0.35us/step grid overhead,
    small enough for >=2 steps (v7x megacore) and the v7x 64 MiB VMEM."""
    ceil256 = -(-batch // 256) * 256
    blk = min(desired, ceil256)
    # Ensure at least 2 grid steps when there is enough work so v7x's two
    # TensorCores both get a share (no-op on single-TC v5e/v6e).
    if ceil256 >= 512:
        blk = min(blk, max(256, (ceil256 // 512) * 256))
    # VMEM guard: double-buffered f32 x tiles + f32 h1/h2 temps (+bf16 copy)
    # scale linearly with the tile width; keep them under ~24 MiB.
    per_col_bytes = 8 * state_dim + 3 * 4 * HIDDEN
    max_blk = max(256, (24 * 1024 * 1024 // per_col_bytes) // 256 * 256)
    return min(blk, max_blk)


def critic_forward(state, params, *, block_b=None, compute_dtype=jnp.bfloat16):
    """state: (B, state_dim) float32 -> (B, 1) float32 values."""
    B, state_dim = state.shape
    if block_b is None:
        block_b = _auto_block_b(B, state_dim)
    num_blocks = pl.cdiv(B, block_b)
    b_pad = num_blocks * block_b

    x = state
    if b_pad != B:  # ragged tail: zero-pad (garbage rows are sliced off below)
        x = jnp.pad(x, ((0, b_pad - B), (0, 0)))

    hidden = params["w2"].shape[0]
    # Cast resident weights ONCE here (not per grid step inside the kernel).
    w1 = params["w1"].astype(compute_dtype)      # (256, state_dim)
    w2 = params["w2"].astype(compute_dtype)      # (256, 256)
    # Pack small vectors into one resident f32 operand: one DMA instead of four.
    vecs = jnp.stack(
        [params["b1"], params["b2"], params["w3"],
         jnp.broadcast_to(params["b3"], (hidden,))],
        axis=1).astype(jnp.float32)              # (256, 4)

    const = lambda arr: pl.BlockSpec(arr.shape, lambda i: (0,) * arr.ndim)
    kernel = functools.partial(_critic_kernel, compute_dtype=compute_dtype)

    out_t = pl.pallas_call(
        kernel,
        out_shape=jax.ShapeDtypeStruct((1, b_pad), jnp.float32),
        grid=(num_blocks,),
        in_specs=[
            pl.BlockSpec((block_b, state_dim), lambda i: (i, 0)),  # streamed x
            const(w1), const(w2), const(vecs),                     # resident
        ],
        out_specs=pl.BlockSpec((1, block_b), lambda i: (0, i)),
        compiler_params=pltpu.CompilerParams(
            dimension_semantics=("parallel",),       # megacore split on v7x
            vmem_limit_bytes=48 * 1024 * 1024,       # safe on v5e/v6e/v7x
        ),
    )(x, w1, w2, vecs)

    return out_t[0, :B].reshape(B, 1)


def init_critic_params(key, state_dim, hidden=HIDDEN):
    """nn.Linear default init U(-1/sqrt(fan_in), +), weights in (out, in) layout."""
    ks = jax.random.split(key, 6)

    def linear(kw, kb, fan_in, fan_out):
        bound = 1.0 / jnp.sqrt(jnp.float32(fan_in))
        w = jax.random.uniform(kw, (fan_out, fan_in), jnp.float32, -bound, bound)
        b = jax.random.uniform(kb, (fan_out,), jnp.float32, -bound, bound)
        return w, b

    w1, b1 = linear(ks[0], ks[1], state_dim, hidden)
    w2, b2 = linear(ks[2], ks[3], hidden, hidden)
    w3, b3 = linear(ks[4], ks[5], hidden, 1)          # w3: (1, hidden), b3: (1,)
    return {"w1": w1, "b1": b1, "w2": w2, "b2": b2, "w3": w3[0], "b3": b3}


def critic_reference(state, p):
    h1 = jnp.maximum(state @ p["w1"].T + p["b1"], 0.0)
    h2 = jnp.maximum(h1 @ p["w2"].T + p["b2"], 0.0)
    return h2 @ p["w3"].reshape(-1, 1) + p["b3"]


if __name__ == "__main__":
    key = jax.random.PRNGKey(0)
    k_param, k_state, k_state2 = jax.random.split(key, 3)

    batch, state_dim = 2, 32
    params = init_critic_params(k_param, state_dim)
    state = jax.random.normal(k_state, (batch, state_dim), jnp.float32)
    ref = critic_reference(state, params)

    # 1) Accurate path (f32 MXU inputs, f32 accumulation).
    out_f32 = jax.block_until_ready(
        critic_forward(state, params, compute_dtype=jnp.float32))
    assert out_f32.shape == (batch, 1), out_f32.shape
    assert jnp.allclose(out_f32, ref, atol=1e-3, rtol=1e-3), (out_f32, ref)

    # 2) Default fast path (bf16 MXU inputs, f32 accumulation).
    out_bf16 = jax.block_until_ready(critic_forward(state, params))
    assert out_bf16.shape == (batch, 1), out_bf16.shape
    assert jnp.allclose(out_bf16, ref, atol=3e-2, rtol=3e-2), (out_bf16, ref)

    # 3) Multi-tile grid + ragged-batch padding path (exercises the pipeline
    #    and the >=2-step auto tile choice).
    batch2 = 600
    state2 = jax.random.normal(k_state2, (batch2, state_dim), jnp.float32)
    out2 = jax.block_until_ready(critic_forward(state2, params))
    ref2 = critic_reference(state2, params)
    assert out2.shape == (batch2, 1), out2.shape
    assert jnp.allclose(out2, ref2, atol=3e-2, rtol=3e-2), (out2, ref2)

    print("KERNEL_OK")
</pallas_src>

<mosaic_0001>
module attributes {stable_mosaic.version = 11 : i64} {
  func.func @_critic_kernel(%arg0: i32, %arg1: memref<256x32xf32, #tpu.memory_space<vmem>>, %arg2: memref<256x32xf32, #tpu.memory_space<vmem>>, %arg3: memref<256x256xf32, #tpu.memory_space<vmem>>, %arg4: memref<256x4xf32, #tpu.memory_space<vmem>>, %arg5: memref<1x256xf32, #tpu.memory_space<vmem>>) attributes {dimension_semantics = [#tpu.dimension_semantics<parallel>], iteration_bounds = array<i64: 1>, scalar_prefetch = 0 : i64, scratch_operands = 0 : i64, tpu.core_type = #tpu.core_type<tc>, window_params = [{transform_indices = @transform_0, window_bounds = array<i64: 256, 32>}, {pipeline_mode = #tpu.pipeline_mode<synchronous>, transform_indices = @transform_1, window_bounds = array<i64: 256, 32>}, {pipeline_mode = #tpu.pipeline_mode<synchronous>, transform_indices = @transform_2, window_bounds = array<i64: 256, 256>}, {pipeline_mode = #tpu.pipeline_mode<synchronous>, transform_indices = @transform_3, window_bounds = array<i64: 256, 4>}, {transform_indices = @transform_4, window_bounds = array<i64: 1, 256>}]} {
    %c0 = arith.constant 0 : index
    %c0_0 = arith.constant 0 : index
    %0 = vector.load %arg4[%c0, %c0_0] : memref<256x4xf32, #tpu.memory_space<vmem>>, vector<256x4xf32>
    %1 = vector.extract_strided_slice %0 {offsets = [0, 0], sizes = [256, 1], strides = [1, 1]} : vector<256x4xf32> to vector<256x1xf32>
    %2 = vector.extract_strided_slice %0 {offsets = [0, 1], sizes = [256, 1], strides = [1, 1]} : vector<256x4xf32> to vector<256x1xf32>
    %3 = vector.extract_strided_slice %0 {offsets = [0, 2], sizes = [256, 1], strides = [1, 1]} : vector<256x4xf32> to vector<256x1xf32>
    %4 = vector.extract_strided_slice %0 {offsets = [0, 3], sizes = [1, 1], strides = [1, 1]} : vector<256x4xf32> to vector<1x1xf32>
    %c0_1 = arith.constant 0 : index
    %c0_2 = arith.constant 0 : index
    %5 = vector.load %arg1[%c0_1, %c0_2] : memref<256x32xf32, #tpu.memory_space<vmem>>, vector<256x32xf32>
    %c0_3 = arith.constant 0 : index
    %c0_4 = arith.constant 0 : index
    %6 = vector.load %arg2[%c0_3, %c0_4] : memref<256x32xf32, #tpu.memory_space<vmem>>, vector<256x32xf32>
    %cst = arith.constant dense<0.000000e+00> : vector<256x256xf32>
    %7 = tpu.matmul %6, %5, %cst {dimension_numbers = #tpu.dot_dimension_numbers<[1], [1], [0], [0], [0, 0, 1, 0], [], []>} : vector<256x32xf32>, vector<256x32xf32>, vector<256x256xf32> -> vector<256x256xf32>
    %8 = vector.broadcast %1 : vector<256x1xf32> to vector<256x256xf32>
    %9 = arith.addf %7, %8 : vector<256x256xf32>
    %cst_5 = arith.constant 0.000000e+00 : f32
    %10 = vector.broadcast %cst_5 : f32 to vector<256x256xf32>
    %11 = arith.maximumf %9, %10 : vector<256x256xf32>
    %c0_6 = arith.constant 0 : index
    %c0_7 = arith.constant 0 : index
    %12 = vector.load %arg3[%c0_6, %c0_7] : memref<256x256xf32, #tpu.memory_space<vmem>>, vector<256x256xf32>
    %cst_8 = arith.constant dense<0.000000e+00> : vector<256x256xf32>
    %13 = tpu.matmul %12, %11, %cst_8 {dimension_numbers = #tpu.dot_dimension_numbers<[1], [0], [0], [1], [0, 0, 1, 1], [], []>} : vector<256x256xf32>, vector<256x256xf32>, vector<256x256xf32> -> vector<256x256xf32>
    %14 = vector.broadcast %2 : vector<256x1xf32> to vector<256x256xf32>
    %15 = arith.addf %13, %14 : vector<256x256xf32>
    %cst_9 = arith.constant 0.000000e+00 : f32
    %16 = vector.broadcast %cst_9 : f32 to vector<256x256xf32>
    %17 = arith.maximumf %15, %16 : vector<256x256xf32>
    %18 = vector.broadcast %3 : vector<256x1xf32> to vector<256x256xf32>
    %19 = arith.mulf %17, %18 : vector<256x256xf32>
    %cst_10 = arith.constant dense<0.000000e+00> : vector<256xf32>
    %20 = vector.multi_reduction <add>, %19, %cst_10 [0] : vector<256x256xf32> to vector<256xf32>
    %21 = vector.shape_cast %20 : vector<256xf32> to vector<1x256xf32>
    %22 = vector.broadcast %4 : vector<1x1xf32> to vector<1x256xf32>
    %23 = arith.addf %21, %22 : vector<1x256xf32>
    %c0_11 = arith.constant 0 : index
    %c0_12 = arith.constant 0 : index
    %24 = vector.load %arg5[%c0_11, %c0_12] : memref<1x256xf32, #tpu.memory_space<vmem>>, vector<1x256xf32>
    tpu.vector_store %arg5[%c0_11, %c0_12], %23 {strides = array<i32>} : memref<1x256xf32, #tpu.memory_space<vmem>>, vector<1x256xf32>,
    return
  }
  func.func @transform_0(%arg0: i32) -> (i32, i32) {
    %c0_i32 = arith.constant 0 : i32
    %c0_i32_0 = arith.constant 0 : i32
    return %arg0, %c0_i32 : i32, i32
  }
  func.func @transform_1(%arg0: i32) -> (i32, i32) {
    %c0_i32 = arith.constant 0 : i32
    %c0_i32_0 = arith.constant 0 : i32
    %c0_i32_1 = arith.constant 0 : i32
    return %c0_i32, %c0_i32_0 : i32, i32
  }
  func.func @transform_2(%arg0: i32) -> (i32, i32) {
    %c0_i32 = arith.constant 0 : i32
    %c0_i32_0 = arith.constant 0 : i32
    %c0_i32_1 = arith.constant 0 : i32
    return %c0_i32, %c0_i32_0 : i32, i32
  }
  func.func @transform_3(%arg0: i32) -> (i32, i32) {
    %c0_i32 = arith.constant 0 : i32
    %c0_i32_0 = arith.constant 0 : i32
    %c0_i32_1 = arith.constant 0 : i32
    return %c0_i32, %c0_i32_0 : i32, i32
  }
  func.func @transform_4(%arg0: i32) -> (i32, i32) {
    %c0_i32 = arith.constant 0 : i32
    %c0_i32_0 = arith.constant 0 : i32
    return %c0_i32, %arg0 : i32, i32
  }
}

</mosaic_0001>

<llo_original>
// kernel: tpu_custom_call.1
$region0: #{tpu_custom_call.1}
  #allocation0 [shape = 'u32[]', space=smem, size = 0x4, offset = 0x4, fixed_abs, tag = 'smem constant byte address 0x4 - core index']
  #allocation1 [shape = 'u32[144,128]{1,0:T(1,128)}', space=vmem, size = 0x12000, scoped, tag = 'internal scratch']
  %s0 = inlined_call_operand.vmem [shape: f32[256,32], index: 0, kind: input, shape index: {}]
  %s1 = inlined_call_operand.vmem [shape: f32[256,32], index: 1, kind: input, shape index: {}]
  %s2 = inlined_call_operand.vmem [shape: f32[256,256], index: 2, kind: input, shape index: {}]
  %s3 = inlined_call_operand.vmem [shape: f32[256,4], index: 3, kind: input, shape index: {}]
  %s4 = inlined_call_operand.hbm [shape: f32[1,256], index: 4, kind: output, shape index: {}]
  %s5 = sld [smem:[#allocation0]]
  $region26: #{tpu_custom_call.1} parent=0
    _
  %s7 = ssub.s32 1, %s5
  %s8 = scalar_select 0, %s7, %s5
  $region1: #{tpu_custom_call.1} parent=0
    #allocation2 [shape = 'u8[1024]{0}', space=vmem, size = 0x400, scoped, tag = 'output window, operand 0, single buffered']
    #allocation3 [shape = 's32[1]{0}', space=sflag, size = 0x4, scoped, tag = 'scoped memory for tpu_custom_call.1']
    %9 = vsyncpa [#allocation3], 0
    // Predicated region
    $region2: #{tpu_custom_call.1} parent=1 // pred_check
      _
    $region3: #{tpu_custom_call.1} parent=1 // pred_check_branch
      %11 = sbr.rel (0) target = $region5
    $region4: #{tpu_custom_call.1} parent=1 // pred_region
      _
    $region5: #{tpu_custom_call.1} parent=1 // pred_fallthru
      _
    // Predicated region
    $region6: #{tpu_custom_call.1} parent=1 // pred_check
      _
    $region7: #{tpu_custom_call.1} parent=1 // pred_check_branch
      %13 = sbr.rel (0) target = $region9
    $region8: #{tpu_custom_call.1} parent=1 // pred_region
      _
    $region9: #{tpu_custom_call.1} parent=1 // pred_fallthru
      _
    // Predicated region
    $region10: #{tpu_custom_call.1} parent=1 // pred_check
      _
    $region11: #{tpu_custom_call.1} parent=1 // pred_check_branch
      %15 = sbr.rel (0) target = $region13
    $region12: #{tpu_custom_call.1} parent=1 // pred_region
      _
    $region13: #{tpu_custom_call.1} parent=1 // pred_fallthru
      _
    // Predicated region
    $region14: #{tpu_custom_call.1} parent=1 // pred_check
      _
    $region15: #{tpu_custom_call.1} parent=1 // pred_check_branch
      %17 = sbr.rel (0) target = $region17
    $region16: #{tpu_custom_call.1} parent=1 // pred_region
      _
    $region17: #{tpu_custom_call.1} parent=1 // pred_fallthru
      _
    %v18 = vld [vmem:[%s3] sm:$0xff]
    %v19 = vld [vmem:[%s3 + $0x8] sm:$0xff]
    %v20 = vld [vmem:[%s3 + $0x10] sm:$0xff]
    %v21 = vld [vmem:[%s3 + $0x18] sm:$0xff]
    %v22 = vld [vmem:[%s3 + $0x20] sm:$0xff]
    %v23 = vld [vmem:[%s3 + $0x28] sm:$0xff]
    %v24 = vld [vmem:[%s3 + $0x30] sm:$0xff]
    %v25 = vld [vmem:[%s3 + $0x38] sm:$0xff]
    %v26 = vld [vmem:[%s3 + $0x40] sm:$0xff]
    %v27 = vld [vmem:[%s3 + $0x48] sm:$0xff]
    %v28 = vld [vmem:[%s3 + $0x50] sm:$0xff]
    %v29 = vld [vmem:[%s3 + $0x58] sm:$0xff]
    %v30 = vld [vmem:[%s3 + $0x60] sm:$0xff]
    %v31 = vld [vmem:[%s3 + $0x68] sm:$0xff]
    %v32 = vld [vmem:[%s3 + $0x70] sm:$0xff]
    %v33 = vld [vmem:[%s3 + $0x78] sm:$0xff]
    %v34 = vld [vmem:[%s3 + $0x80] sm:$0xff]
    %v35 = vld [vmem:[%s3 + $0x88] sm:$0xff]
    %v36 = vld [vmem:[%s3 + $0x90] sm:$0xff]
    %v37 = vld [vmem:[%s3 + $0x98] sm:$0xff]
    %v38 = vld [vmem:[%s3 + $0xa0] sm:$0xff]
    %v39 = vld [vmem:[%s3 + $0xa8] sm:$0xff]
    %v40 = vld [vmem:[%s3 + $0xb0] sm:$0xff]
    %v41 = vld [vmem:[%s3 + $0xb8] sm:$0xff]
    %v42 = vld [vmem:[%s3 + $0xc0] sm:$0xff]
    %v43 = vld [vmem:[%s3 + $0xc8] sm:$0xff]
    %v44 = vld [vmem:[%s3 + $0xd0] sm:$0xff]
    %v45 = vld [vmem:[%s3 + $0xd8] sm:$0xff]
    %v46 = vld [vmem:[%s3 + $0xe0] sm:$0xff]
    %v47 = vld [vmem:[%s3 + $0xe8] sm:$0xff]
    %v48 = vld [vmem:[%s3 + $0xf0] sm:$0xff]
    %v49 = vld [vmem:[%s3 + $0xf8] sm:$0xff]
    %v50 = vld [vmem:[%s0] sm:$0xff]
    %v51 = vld [vmem:[%s0 + $0x8] sm:$0xff]
    %v52 = vld [vmem:[%s0 + $0x10] sm:$0xff]
    %v53 = vld [vmem:[%s0 + $0x18] sm:$0xff]
    %v54 = vld [vmem:[%s0 + $0x20] sm:$0xff]
    %v55 = vld [vmem:[%s0 + $0x28] sm:$0xff]
    %v56 = vld [vmem:[%s0 + $0x30] sm:$0xff]
    %v57 = vld [vmem:[%s0 + $0x38] sm:$0xff]
    %v58 = vld [vmem:[%s0 + $0x40] sm:$0xff]
    %v59 = vld [vmem:[%s0 + $0x48] sm:$0xff]
    %v60 = vld [vmem:[%s0 + $0x50] sm:$0xff]
    %v61 = vld [vmem:[%s0 + $0x58] sm:$0xff]
    %v62 = vld [vmem:[%s0 + $0x60] sm:$0xff]
    %v63 = vld [vmem:[%s0 + $0x68] sm:$0xff]
    %v64 = vld [vmem:[%s0 + $0x70] sm:$0xff]
    %v65 = vld [vmem:[%s0 + $0x78] sm:$0xff]
    %v66 = vld [vmem:[%s0 + $0x80] sm:$0xff]
    %v67 = vld [vmem:[%s0 + $0x88] sm:$0xff]
    %v68 = vld [vmem:[%s0 + $0x90] sm:$0xff]
    %v69 = vld [vmem:[%s0 + $0x98] sm:$0xff]
    %v70 = vld [vmem:[%s0 + $0xa0] sm:$0xff]
    %v71 = vld [vmem:[%s0 + $0xa8] sm:$0xff]
    %v72 = vld [vmem:[%s0 + $0xb0] sm:$0xff]
    %v73 = vld [vmem:[%s0 + $0xb8] sm:$0xff]
    %v74 = vld [vmem:[%s0 + $0xc0] sm:$0xff]
    %v75 = vld [vmem:[%s0 + $0xc8] sm:$0xff]
    %v76 = vld [vmem:[%s0 + $0xd0] sm:$0xff]
    %v77 = vld [vmem:[%s0 + $0xd8] sm:$0xff]
    %v78 = vld [vmem:[%s0 + $0xe0] sm:$0xff]
    %v79 = vld [vmem:[%s0 + $0xe8] sm:$0xff]
    %v80 = vld [vmem:[%s0 + $0xf0] sm:$0xff]
    %v81 = vld [vmem:[%s0 + $0xf8] sm:$0xff]
    %v82 = vld [vmem:[%s1] sm:$0xff]
    %v83 = vld [vmem:[%s1 + $0x8] sm:$0xff]
    %v84 = vld [vmem:[%s1 + $0x10] sm:$0xff]
    %v85 = vld [vmem:[%s1 + $0x18] sm:$0xff]
    %v86 = vld [vmem:[%s1 + $0x20] sm:$0xff]
    %v87 = vld [vmem:[%s1 + $0x28] sm:$0xff]
    %v88 = vld [vmem:[%s1 + $0x30] sm:$0xff]
    %v89 = vld [vmem:[%s1 + $0x38] sm:$0xff]
    %v90 = vld [vmem:[%s1 + $0x40] sm:$0xff]
    %v91 = vld [vmem:[%s1 + $0x48] sm:$0xff]
    %v92 = vld [vmem:[%s1 + $0x50] sm:$0xff]
    %v93 = vld [vmem:[%s1 + $0x58] sm:$0xff]
    %v94 = vld [vmem:[%s1 + $0x60] sm:$0xff]
    %v95 = vld [vmem:[%s1 + $0x68] sm:$0xff]
    %v96 = vld [vmem:[%s1 + $0x70] sm:$0xff]
    %v97 = vld [vmem:[%s1 + $0x78] sm:$0xff]
    %v98 = vld [vmem:[%s1 + $0x80] sm:$0xff]
    %v99 = vld [vmem:[%s1 + $0x88] sm:$0xff]
    %v100 = vld [vmem:[%s1 + $0x90] sm:$0xff]
    %v101 = vld [vmem:[%s1 + $0x98] sm:$0xff]
    %v102 = vld [vmem:[%s1 + $0xa0] sm:$0xff]
    %v103 = vld [vmem:[%s1 + $0xa8] sm:$0xff]
    %v104 = vld [vmem:[%s1 + $0xb0] sm:$0xff]
    %v105 = vld [vmem:[%s1 + $0xb8] sm:$0xff]
    %v106 = vld [vmem:[%s1 + $0xc0] sm:$0xff]
    %v107 = vld [vmem:[%s1 + $0xc8] sm:$0xff]
    %v108 = vld [vmem:[%s1 + $0xd0] sm:$0xff]
    %v109 = vld [vmem:[%s1 + $0xd8] sm:$0xff]
    %v110 = vld [vmem:[%s1 + $0xe0] sm:$0xff]
    %v111 = vld [vmem:[%s1 + $0xe8] sm:$0xff]
    %v112 = vld [vmem:[%s1 + $0xf0] sm:$0xff]
    %v113 = vld [vmem:[%s1 + $0xf8] sm:$0xff]
    %115 = vset.pattern.permute.xlu0 0
    %116 = vperm.xlu0 %115, %v18
    %v117 = vpop.permute.xlu0 %116
    %120 = vset.pattern.permute.xlu0 0
    %121 = vperm.xlu0 %120, %v19
    %v122 = vpop.permute.xlu0 %121
    %125 = vset.pattern.permute.xlu0 0
    %126 = vperm.xlu0 %125, %v20
    %v127 = vpop.permute.xlu0 %126
    %130 = vset.pattern.permute.xlu0 0
    %131 = vperm.xlu0 %130, %v21
    %v132 = vpop.permute.xlu0 %131
    %135 = vset.pattern.permute.xlu0 0
    %136 = vperm.xlu0 %135, %v22
    %v137 = vpop.permute.xlu0 %136
    %140 = vset.pattern.permute.xlu0 0
    %141 = vperm.xlu0 %140, %v23
    %v142 = vpop.permute.xlu0 %141
    %145 = vset.pattern.permute.xlu0 0
    %146 = vperm.xlu0 %145, %v24
    %v147 = vpop.permute.xlu0 %146
    %150 = vset.pattern.permute.xlu0 0
    %151 = vperm.xlu0 %150, %v25
    %v152 = vpop.permute.xlu0 %151
    %155 = vset.pattern.permute.xlu0 0
    %156 = vperm.xlu0 %155, %v26
    %v157 = vpop.permute.xlu0 %156
    %160 = vset.pattern.permute.xlu0 0
    %161 = vperm.xlu0 %160, %v27
    %v162 = vpop.permute.xlu0 %161
    %165 = vset.pattern.permute.xlu0 0
    %166 = vperm.xlu0 %165, %v28
    %v167 = vpop.permute.xlu0 %166
    %170 = vset.pattern.permute.xlu0 0
    %171 = vperm.xlu0 %170, %v29
    %v172 = vpop.permute.xlu0 %171
    %175 = vset.pattern.permute.xlu0 0
    %176 = vperm.xlu0 %175, %v30
    %v177 = vpop.permute.xlu0 %176
    %180 = vset.pattern.permute.xlu0 0
    %181 = vperm.xlu0 %180, %v31
    %v182 = vpop.permute.xlu0 %181
    %185 = vset.pattern.permute.xlu0 0
    %186 = vperm.xlu0 %185, %v32
    %v187 = vpop.permute.xlu0 %186
    %190 = vset.pattern.permute.xlu0 0
    %191 = vperm.xlu0 %190, %v33
    %v192 = vpop.permute.xlu0 %191
    %195 = vset.pattern.permute.xlu0 0
    %196 = vperm.xlu0 %195, %v34
    %v197 = vpop.permute.xlu0 %196
    %200 = vset.pattern.permute.xlu0 0
    %201 = vperm.xlu0 %200, %v35
    %v202 = vpop.permute.xlu0 %201
    %205 = vset.pattern.permute.xlu0 0
    %206 = vperm.xlu0 %205, %v36
    %v207 = vpop.permute.xlu0 %206
    %210 = vset.pattern.permute.xlu0 0
    %211 = vperm.xlu0 %210, %v37
    %v212 = vpop.permute.xlu0 %211
    %215 = vset.pattern.permute.xlu0 0
    %216 = vperm.xlu0 %215, %v38
    %v217 = vpop.permute.xlu0 %216
    %220 = vset.pattern.permute.xlu0 0
    %221 = vperm.xlu0 %220, %v39
    %v222 = vpop.permute.xlu0 %221
    %225 = vset.pattern.permute.xlu0 0
    %226 = vperm.xlu0 %225, %v40
    %v227 = vpop.permute.xlu0 %226
    %230 = vset.pattern.permute.xlu0 0
    %231 = vperm.xlu0 %230, %v41
    %v232 = vpop.permute.xlu0 %231
    %235 = vset.pattern.permute.xlu0 0
    %236 = vperm.xlu0 %235, %v42
    %v237 = vpop.permute.xlu0 %236
    %240 = vset.pattern.permute.xlu0 0
    %241 = vperm.xlu0 %240, %v43
    %v242 = vpop.permute.xlu0 %241
    %245 = vset.pattern.permute.xlu0 0
    %246 = vperm.xlu0 %245, %v44
    %v247 = vpop.permute.xlu0 %246
    %250 = vset.pattern.permute.xlu0 0
    %251 = vperm.xlu0 %250, %v45
    %v252 = vpop.permute.xlu0 %251
    %255 = vset.pattern.permute.xlu0 0
    %256 = vperm.xlu0 %255, %v46
    %v257 = vpop.permute.xlu0 %256
    %260 = vset.pattern.permute.xlu0 0
    %261 = vperm.xlu0 %260, %v47
    %v262 = vpop.permute.xlu0 %261
    %265 = vset.pattern.permute.xlu0 0
    %266 = vperm.xlu0 %265, %v48
    %v267 = vpop.permute.xlu0 %266
    %270 = vset.pattern.permute.xlu0 0
    %271 = vperm.xlu0 %270, %v49
    %v272 = vpop.permute.xlu0 %271
    %vm274 = vcmask 261120
    %v276 = vsel %vm274, %v82, 0
    %v279 = vsel %vm274, %v83, 0
    %v282 = vsel %vm274, %v84, 0
    %v285 = vsel %vm274, %v85, 0
    %v288 = vsel %vm274, %v86, 0
    %v291 = vsel %vm274, %v87, 0
    %v294 = vsel %vm274, %v88, 0
    %v297 = vsel %vm274, %v89, 0
    %v300 = vsel %vm274, %v90, 0
    %v303 = vsel %vm274, %v91, 0
    %v306 = vsel %vm274, %v92, 0
    %v309 = vsel %vm274, %v93, 0
    %v312 = vsel %vm274, %v94, 0
    %v315 = vsel %vm274, %v95, 0
    %v318 = vsel %vm274, %v96, 0
    %v321 = vsel %vm274, %v97, 0
    %v324 = vsel %vm274, %v98, 0
    %v327 = vsel %vm274, %v99, 0
    %v330 = vsel %vm274, %v100, 0
    %v333 = vsel %vm274, %v101, 0
    %v336 = vsel %vm274, %v102, 0
    %v339 = vsel %vm274, %v103, 0
    %v342 = vsel %vm274, %v104, 0
    %v345 = vsel %vm274, %v105, 0
    %v348 = vsel %vm274, %v106, 0
    %v351 = vsel %vm274, %v107, 0
    %v354 = vsel %vm274, %v108, 0
    %v357 = vsel %vm274, %v109, 0
    %v360 = vsel %vm274, %v110, 0
    %v363 = vsel %vm274, %v111, 0
    %v366 = vsel %vm274, %v112, 0
    %v369 = vsel %vm274, %v113, 0
    %v372 = vsel %vm274, %v50, 0
    %v375 = vsel %vm274, %v51, 0
    %v378 = vsel %vm274, %v52, 0
    %v381 = vsel %vm274, %v53, 0
    %v384 = vsel %vm274, %v54, 0
    %v387 = vsel %vm274, %v55, 0
    %v390 = vsel %vm274, %v56, 0
    %v393 = vsel %vm274, %v57, 0
    %v396 = vsel %vm274, %v58, 0
    %v399 = vsel %vm274, %v59, 0
    %v402 = vsel %vm274, %v60, 0
    %v405 = vsel %vm274, %v61, 0
    %v408 = vsel %vm274, %v62, 0
    %v411 = vsel %vm274, %v63, 0
    %v414 = vsel %vm274, %v64, 0
    %v417 = vsel %vm274, %v65, 0
    %v420 = vsel %vm274, %v66, 0
    %v423 = vsel %vm274, %v67, 0
    %v426 = vsel %vm274, %v68, 0
    %v429 = vsel %vm274, %v69, 0
    %v432 = vsel %vm274, %v70, 0
    %v435 = vsel %vm274, %v71, 0
    %v438 = vsel %vm274, %v72, 0
    %v441 = vsel %vm274, %v73, 0
    %v444 = vsel %vm274, %v74, 0
    %v447 = vsel %vm274, %v75, 0
    %v450 = vsel %vm274, %v76, 0
    %v453 = vsel %vm274, %v77, 0
    %v456 = vsel %vm274, %v78, 0
    %v459 = vsel %vm274, %v79, 0
    %v462 = vsel %vm274, %v80, 0
    %v465 = vsel %vm274, %v81, 0
    %467 = vmatprep.subr.mxu0 0.0
    %468 = vmatpush1.xpose.msra.mxu0 %v372
    %469 = vmatprep.subr.mxu0 0.0
    %470 = vmatpush1.xpose.msra.mxu0 %v375
    %471 = vmatprep.subr.mxu0 0.0
    %472 = vmatpush1.xpose.msra.mxu0 %v378
    %473 = vmatprep.subr.mxu0 0.0
    %474 = vmatpush1.xpose.msra.mxu0 %v381
    %475 = vmatprep.subr.mxu0 0.0
    %476 = vmatpush1.xpose.msra.mxu0 %v384
    %477 = vmatprep.subr.mxu0 0.0
    %478 = vmatpush1.xpose.msra.mxu0 %v387
    %479 = vmatprep.subr.mxu0 0.0
    %480 = vmatpush1.xpose.msra.mxu0 %v390
    %481 = vmatprep.subr.mxu0 0.0
    %482 = vmatpush1.xpose.msra.mxu0 %v393
    %483 = vmatprep.subr.mxu0 0.0
    %484 = vmatpush1.xpose.msra.mxu0 %v396
    %485 = vmatprep.subr.mxu0 0.0
    %486 = vmatpush1.xpose.msra.mxu0 %v399
    %487 = vmatprep.subr.mxu0 0.0
    %488 = vmatpush1.xpose.msra.mxu0 %v402
    %489 = vmatprep.subr.mxu0 0.0
    %490 = vmatpush1.xpose.msra.mxu0 %v405
    %491 = vmatprep.subr.mxu0 0.0
    %492 = vmatpush1.xpose.msra.mxu0 %v408
    %493 = vmatprep.subr.mxu0 0.0
    %494 = vmatpush1.xpose.msra.mxu0 %v411
    %495 = vmatprep.subr.mxu0 0.0
    %496 = vmatpush1.xpose.msra.mxu0 %v414
    %497 = vmatprep.subr.mxu0 0.0
    %498 = vmatpush1.xpose.msra.mxu0 %v417
    %499 = vmatprep.subr.mxu0 0.0
    %500 = vmatpush1.xpose.msra.mxu0 %v420
    %501 = vmatprep.subr.mxu0 0.0
    %502 = vmatpush1.xpose.msra.mxu0 %v423
    %503 = vmatprep.subr.mxu0 0.0
    %504 = vmatpush1.xpose.msra.mxu0 %v426
    %505 = vmatprep.subr.mxu0 0.0
    %506 = vmatpush1.xpose.msra.mxu0 %v429
    %507 = vmatprep.subr.mxu0 0.0
    %508 = vmatpush1.xpose.msra.mxu0 %v432
    %509 = vmatprep.subr.mxu0 0.0
    %510 = vmatpush1.xpose.msra.mxu0 %v435
    %511 = vmatprep.subr.mxu0 0.0
    %512 = vmatpush1.xpose.msra.mxu0 %v438
    %513 = vmatprep.subr.mxu0 0.0
    %514 = vmatpush1.xpose.msra.mxu0 %v441
    %515 = vmatprep.subr.mxu0 0.0
    %516 = vmatpush1.xpose.msra.mxu0 %v444
    %517 = vmatprep.subr.mxu0 0.0
    %518 = vmatpush1.xpose.msra.mxu0 %v447
    %519 = vmatprep.subr.mxu0 0.0
    %520 = vmatpush1.xpose.msra.mxu0 %v450
    %521 = vmatprep.subr.mxu0 0.0
    %522 = vmatpush1.xpose.msra.mxu0 %v453
    %523 = vmatprep.subr.mxu0 0.0
    %524 = vmatpush1.xpose.msra.mxu0 %v456
    %525 = vmatprep.subr.mxu0 0.0
    %526 = vmatpush1.xpose.msra.mxu0 %v459
    %527 = vmatprep.subr.mxu0 0.0
    %528 = vmatpush1.xpose.msra.mxu0 %v462
    %529 = vmatprep.subr.mxu0 0.0
    %530 = vmatpush1.xpose.msra.mxu0 %v465
    %531 = vmatprep.mubr.f32.mxu0 0.0
    %532 = vmatmul.mubr.f32.gmra.mrb[0].mxu0 %v276
    %v533 = vpop.f32.mrb[0].mxu0
    %v534 = vadd.f32 %v117, %v533
    %v535 = vpop.f32.mrb[0].mxu0
    %v536 = vadd.f32 %v117, %v535
    %537 = vmatprep.mubr.f32.mxu0 0.0
    %538 = vmatmul.mubr.f32.gmra.mrb[0].mxu0 %v279
    %v539 = vpop.f32.mrb[0].mxu0
    %v540 = vadd.f32 %v122, %v539
    %v541 = vpop.f32.mrb[0].mxu0
    %v542 = vadd.f32 %v122, %v541
    %543 = vmatprep.mubr.f32.mxu0 0.0
    %544 = vmatmul.mubr.f32.gmra.mrb[0].mxu0 %v282
    %v545 = vpop.f32.mrb[0].mxu0
    %v546 = vadd.f32 %v127, %v545
    %v547 = vpop.f32.mrb[0].mxu0
    %v548 = vadd.f32 %v127, %v547
    %549 = vmatprep.mubr.f32.mxu0 0.0
    %550 = vmatmul.mubr.f32.gmra.mrb[0].mxu0 %v285
    %v551 = vpop.f32.mrb[0].mxu0
    %v552 = vadd.f32 %v132, %v551
    %v553 = vpop.f32.mrb[0].mxu0
    %v554 = vadd.f32 %v132, %v553
    %555 = vmatprep.mubr.f32.mxu0 0.0
    %556 = vmatmul.mubr.f32.gmra.mrb[0].mxu0 %v288
    %v557 = vpop.f32.mrb[0].mxu0
    %v558 = vadd.f32 %v137, %v557
    %v559 = vpop.f32.mrb[0].mxu0
    %v560 = vadd.f32 %v137, %v559
    %561 = vmatprep.mubr.f32.mxu0 0.0
    %562 = vmatmul.mubr.f32.gmra.mrb[0].mxu0 %v291
    %v563 = vpop.f32.mrb[0].mxu0
    %v564 = vadd.f32 %v142, %v563
    %v565 = vpop.f32.mrb[0].mxu0
    %v566 = vadd.f32 %v142, %v565
    %567 = vmatprep.mubr.f32.mxu0 0.0
    %568 = vmatmul.mubr.f32.gmra.mrb[0].mxu0 %v294
    %v569 = vpop.f32.mrb[0].mxu0
    %v570 = vadd.f32 %v147, %v569
    %v571 = vpop.f32.mrb[0].mxu0
    %v572 = vadd.f32 %v147, %v571
    %573 = vmatprep.mubr.f32.mxu0 0.0
    %574 = vmatmul.mubr.f32.gmra.mrb[0].mxu0 %v297
    %v575 = vpop.f32.mrb[0].mxu0
    %v576 = vadd.f32 %v152, %v575
    %v577 = vpop.f32.mrb[0].mxu0
    %v578 = vadd.f32 %v152, %v577
    %579 = vmatprep.mubr.f32.mxu0 0.0
    %580 = vmatmul.mubr.f32.gmra.mrb[0].mxu0 %v300
    %v581 = vpop.f32.mrb[0].mxu0
    %v582 = vadd.f32 %v157, %v581
    %v583 = vpop.f32.mrb[0].mxu0
    %v584 = vadd.f32 %v157, %v583
    %585 = vmatprep.mubr.f32.mxu0 0.0
    %586 = vmatmul.mubr.f32.gmra.mrb[0].mxu0 %v303
    %v587 = vpop.f32.mrb[0].mxu0
    %v588 = vadd.f32 %v162, %v587
    %v589 = vpop.f32.mrb[0].mxu0
    %v590 = vadd.f32 %v162, %v589
    %591 = vmatprep.mubr.f32.mxu0 0.0
    %592 = vmatmul.mubr.f32.gmra.mrb[0].mxu0 %v306
    %v593 = vpop.f32.mrb[0].mxu0
    %v594 = vadd.f32 %v167, %v593
    %v595 = vpop.f32.mrb[0].mxu0
    %v596 = vadd.f32 %v167, %v595
    %597 = vmatprep.mubr.f32.mxu0 0.0
    %598 = vmatmul.mubr.f32.gmra.mrb[0].mxu0 %v309
    %v599 = vpop.f32.mrb[0].mxu0
    %v600 = vadd.f32 %v172, %v599
    %v601 = vpop.f32.mrb[0].mxu0
    %v602 = vadd.f32 %v172, %v601
    %603 = vmatprep.mubr.f32.mxu0 0.0
    %604 = vmatmul.mubr.f32.gmra.mrb[0].mxu0 %v312
    %v605 = vpop.f32.mrb[0].mxu0
    %v606 = vadd.f32 %v177, %v605
    %v607 = vpop.f32.mrb[0].mxu0
    %v608 = vadd.f32 %v177, %v607
    %609 = vmatprep.mubr.f32.mxu0 0.0
    %610 = vmatmul.mubr.f32.gmra.mrb[0].mxu0 %v315
    %v611 = vpop.f32.mrb[0].mxu0
    %v612 = vadd.f32 %v182, %v611
    %v613 = vpop.f32.mrb[0].mxu0
    %v614 = vadd.f32 %v182, %v613
    %615 = vmatprep.mubr.f32.mxu0 0.0
    %616 = vmatmul.mubr.f32.gmra.mrb[0].mxu0 %v318
    %v617 = vpop.f32.mrb[0].mxu0
    %v618 = vadd.f32 %v187, %v617
    %v619 = vpop.f32.mrb[0].mxu0
    %v620 = vadd.f32 %v187, %v619
    %621 = vmatprep.mubr.f32.mxu0 0.0
    %622 = vmatmul.mubr.f32.gmra.mrb[0].mxu0 %v321
    %v623 = vpop.f32.mrb[0].mxu0
    %v624 = vadd.f32 %v192, %v623
    %v625 = vpop.f32.mrb[0].mxu0
    %v626 = vadd.f32 %v192, %v625
    %627 = vmatprep.mubr.f32.mxu0 0.0
    %628 = vmatmul.mubr.f32.gmra.mrb[0].mxu0 %v324
    %v629 = vpop.f32.mrb[0].mxu0
    %v630 = vadd.f32 %v197, %v629
    %v631 = vpop.f32.mrb[0].mxu0
    %v632 = vadd.f32 %v197, %v631
    %633 = vmatprep.mubr.f32.mxu0 0.0
    %634 = vmatmul.mubr.f32.gmra.mrb[0].mxu0 %v327
    %v635 = vpop.f32.mrb[0].mxu0
    %v636 = vadd.f32 %v202, %v635
    %v637 = vpop.f32.mrb[0].mxu0
    %v638 = vadd.f32 %v202, %v637
    %639 = vmatprep.mubr.f32.mxu0 0.0
    %640 = vmatmul.mubr.f32.gmra.mrb[0].mxu0 %v330
    %v641 = vpop.f32.mrb[0].mxu0
    %v642 = vadd.f32 %v207, %v641
    %v643 = vpop.f32.mrb[0].mxu0
    %v644 = vadd.f32 %v207, %v643
    %645 = vmatprep.mubr.f32.mxu0 0.0
    %646 = vmatmul.mubr.f32.gmra.mrb[0].mxu0 %v333
    %v647 = vpop.f32.mrb[0].mxu0
    %v648 = vadd.f32 %v212, %v647
    %v649 = vpop.f32.mrb[0].mxu0
    %v650 = vadd.f32 %v212, %v649
    %651 = vmatprep.mubr.f32.mxu0 0.0
    %652 = vmatmul.mubr.f32.gmra.mrb[0].mxu0 %v336
    %v653 = vpop.f32.mrb[0].mxu0
    %v654 = vadd.f32 %v217, %v653
    %v655 = vpop.f32.mrb[0].mxu0
    %v656 = vadd.f32 %v217, %v655
    %657 = vmatprep.mubr.f32.mxu0 0.0
    %658 = vmatmul.mubr.f32.gmra.mrb[0].mxu0 %v339
    %v659 = vpop.f32.mrb[0].mxu0
    %v660 = vadd.f32 %v222, %v659
    %v661 = vpop.f32.mrb[0].mxu0
    %v662 = vadd.f32 %v222, %v661
    %663 = vmatprep.mubr.f32.mxu0 0.0
    %664 = vmatmul.mubr.f32.gmra.mrb[0].mxu0 %v342
    %v665 = vpop.f32.mrb[0].mxu0
    %v666 = vadd.f32 %v227, %v665
    %v667 = vpop.f32.mrb[0].mxu0
    %v668 = vadd.f32 %v227, %v667
    %669 = vmatprep.mubr.f32.mxu0 0.0
    %670 = vmatmul.mubr.f32.gmra.mrb[0].mxu0 %v345
    %v671 = vpop.f32.mrb[0].mxu0
    %v672 = vadd.f32 %v232, %v671
    %v673 = vpop.f32.mrb[0].mxu0
    %v674 = vadd.f32 %v232, %v673
    %675 = vmatprep.mubr.f32.mxu0 0.0
    %676 = vmatmul.mubr.f32.gmra.mrb[0].mxu0 %v348
    %v677 = vpop.f32.mrb[0].mxu0
    %v678 = vadd.f32 %v237, %v677
    %v679 = vpop.f32.mrb[0].mxu0
    %v680 = vadd.f32 %v237, %v679
    %681 = vmatprep.mubr.f32.mxu0 0.0
    %682 = vmatmul.mubr.f32.gmra.mrb[0].mxu0 %v351
    %v683 = vpop.f32.mrb[0].mxu0
    %v684 = vadd.f32 %v242, %v683
    %v685 = vpop.f32.mrb[0].mxu0
    %v686 = vadd.f32 %v242, %v685
    %687 = vmatprep.mubr.f32.mxu0 0.0
    %688 = vmatmul.mubr.f32.gmra.mrb[0].mxu0 %v354
    %v689 = vpop.f32.mrb[0].mxu0
    %v690 = vadd.f32 %v247, %v689
    %v691 = vpop.f32.mrb[0].mxu0
    %v692 = vadd.f32 %v247, %v691
    %693 = vmatprep.mubr.f32.mxu0 0.0
    %694 = vmatmul.mubr.f32.gmra.mrb[0].mxu0 %v357
    %v695 = vpop.f32.mrb[0].mxu0
    %v696 = vadd.f32 %v252, %v695
    %v697 = vpop.f32.mrb[0].mxu0
    %v698 = vadd.f32 %v252, %v697
    %699 = vmatprep.mubr.f32.mxu0 0.0
    %700 = vmatmul.mubr.f32.gmra.mrb[0].mxu0 %v360
    %v701 = vpop.f32.mrb[0].mxu0
    %v702 = vadd.f32 %v257, %v701
    %v703 = vpop.f32.mrb[0].mxu0
    %v704 = vadd.f32 %v257, %v703
    %705 = vmatprep.mubr.f32.mxu0 0.0
    %706 = vmatmul.mubr.f32.gmra.mrb[0].mxu0 %v363
    %v707 = vpop.f32.mrb[0].mxu0
    %v708 = vadd.f32 %v262, %v707
    %v709 = vpop.f32.mrb[0].mxu0
    %v710 = vadd.f32 %v262, %v709
    %711 = vmatprep.mubr.f32.mxu0 0.0
    %712 = vmatmul.mubr.f32.gmra.mrb[0].mxu0 %v366
    %v713 = vpop.f32.mrb[0].mxu0
    %v714 = vadd.f32 %v267, %v713
    %v715 = vpop.f32.mrb[0].mxu0
    %v716 = vadd.f32 %v267, %v715
    %717 = vmatprep.mubr.f32.mxu0 0.0
    %718 = vmatmul.mubr.f32.gmra.mrb[0].mxu0 %v369
    %v719 = vpop.f32.mrb[0].mxu0
    %v720 = vadd.f32 %v272, %v719
    %v721 = vpop.f32.mrb[0].mxu0
    %v722 = vadd.f32 %v272, %v721
    %723 = vdwg.mxu0
    %v724 = vmax.f32 %v534, 0.0
    %v725 = vmax.f32 %v536, 0.0
    %v726 = vmax.f32 %v540, 0.0
    %v727 = vmax.f32 %v542, 0.0
    %v728 = vmax.f32 %v546, 0.0
    %v729 = vmax.f32 %v548, 0.0
    %v730 = vmax.f32 %v552, 0.0
    %v731 = vmax.f32 %v554, 0.0
    %v732 = vmax.f32 %v558, 0.0
    %v733 = vmax.f32 %v560, 0.0
    %v734 = vmax.f32 %v564, 0.0
    %v735 = vmax.f32 %v566, 0.0
    %v736 = vmax.f32 %v570, 0.0
    %v737 = vmax.f32 %v572, 0.0
    %v738 = vmax.f32 %v576, 0.0
    %v739 = vmax.f32 %v578, 0.0
    %v740 = vmax.f32 %v582, 0.0
    %v741 = vmax.f32 %v584, 0.0
    %v742 = vmax.f32 %v588, 0.0
    %v743 = vmax.f32 %v590, 0.0
    %v744 = vmax.f32 %v594, 0.0
    %v745 = vmax.f32 %v596, 0.0
    %v746 = vmax.f32 %v600, 0.0
    %v747 = vmax.f32 %v602, 0.0
    %v748 = vmax.f32 %v606, 0.0
    %v749 = vmax.f32 %v608, 0.0
    %v750 = vmax.f32 %v612, 0.0
    %v751 = vmax.f32 %v614, 0.0
    %v752 = vmax.f32 %v618, 0.0
    %v753 = vmax.f32 %v620, 0.0
    %v754 = vmax.f32 %v624, 0.0
    %v755 = vmax.f32 %v626, 0.0
    %v756 = vmax.f32 %v630, 0.0
    %v757 = vmax.f32 %v632, 0.0
    %v758 = vmax.f32 %v636, 0.0
    %v759 = vmax.f32 %v638, 0.0
    %v760 = vmax.f32 %v642, 0.0
    %v761 = vmax.f32 %v644, 0.0
    %v762 = vmax.f32 %v648, 0.0
    %v763 = vmax.f32 %v650, 0.0
    %v764 = vmax.f32 %v654, 0.0
    %v765 = vmax.f32 %v656, 0.0
    %v766 = vmax.f32 %v660, 0.0
    %v767 = vmax.f32 %v662, 0.0
    %v768 = vmax.f32 %v666, 0.0
    %v769 = vmax.f32 %v668, 0.0
    %v770 = vmax.f32 %v672, 0.0
    %v771 = vmax.f32 %v674, 0.0
    %v772 = vmax.f32 %v678, 0.0
    %v773 = vmax.f32 %v680, 0.0
    %v774 = vmax.f32 %v684, 0.0
    %v775 = vmax.f32 %v686, 0.0
    %v776 = vmax.f32 %v690, 0.0
    %v777 = vmax.f32 %v692, 0.0
    %v778 = vmax.f32 %v696, 0.0
    %v779 = vmax.f32 %v698, 0.0
    %v780 = vmax.f32 %v702, 0.0
    %v781 = vmax.f32 %v704, 0.0
    %v782 = vmax.f32 %v708, 0.0
    %v783 = vmax.f32 %v710, 0.0
    %v784 = vmax.f32 %v714, 0.0
    %v785 = vmax.f32 %v716, 0.0
    %v786 = vmax.f32 %v720, 0.0
    %v787 = vmax.f32 %v722, 0.0
    %v788 = vld [vmem:[%s2] sm:$0xff]
    %v789 = vld [vmem:[%s2 + $0x8] sm:$0xff]
    %v790 = vld [vmem:[%s2 + $0x10] sm:$0xff]
    %v791 = vld [vmem:[%s2 + $0x18] sm:$0xff]
    %v792 = vld [vmem:[%s2 + $0x20] sm:$0xff]
    %v793 = vld [vmem:[%s2 + $0x28] sm:$0xff]
    %v794 = vld [vmem:[%s2 + $0x30] sm:$0xff]
    %v795 = vld [vmem:[%s2 + $0x38] sm:$0xff]
    %v796 = vld [vmem:[%s2 + $0x40] sm:$0xff]
    %v797 = vld [vmem:[%s2 + $0x48] sm:$0xff]
    %v798 = vld [vmem:[%s2 + $0x50] sm:$0xff]
    %v799 = vld [vmem:[%s2 + $0x58] sm:$0xff]
    %v800 = vld [vmem:[%s2 + $0x60] sm:$0xff]
    %v801 = vld [vmem:[%s2 + $0x68] sm:$0xff]
    %v802 = vld [vmem:[%s2 + $0x70] sm:$0xff]
    %v803 = vld [vmem:[%s2 + $0x78] sm:$0xff]
    %v804 = vld [vmem:[%s2 + $0x80] sm:$0xff]
    %v805 = vld [vmem:[%s2 + $0x88] sm:$0xff]
    %v806 = vld [vmem:[%s2 + $0x90] sm:$0xff]
    %v807 = vld [vmem:[%s2 + $0x98] sm:$0xff]
    %v808 = vld [vmem:[%s2 + $0xa0] sm:$0xff]
    %v809 = vld [vmem:[%s2 + $0xa8] sm:$0xff]
    %v810 = vld [vmem:[%s2 + $0xb0] sm:$0xff]
    %v811 = vld [vmem:[%s2 + $0xb8] sm:$0xff]
    %v812 = vld [vmem:[%s2 + $0xc0] sm:$0xff]
    %v813 = vld [vmem:[%s2 + $0xc8] sm:$0xff]
    %v814 = vld [vmem:[%s2 + $0xd0] sm:$0xff]
    %v815 = vld [vmem:[%s2 + $0xd8] sm:$0xff]
    %v816 = vld [vmem:[%s2 + $0xe0] sm:$0xff]
    %v817 = vld [vmem:[%s2 + $0xe8] sm:$0xff]
    %v818 = vld [vmem:[%s2 + $0xf0] sm:$0xff]
    %v819 = vld [vmem:[%s2 + $0xf8] sm:$0xff]
    %v820 = vld [vmem:[%s2 + $0x100] sm:$0xff]
    %v821 = vld [vmem:[%s2 + $0x108] sm:$0xff]
    %v822 = vld [vmem:[%s2 + $0x110] sm:$0xff]
    %v823 = vld [vmem:[%s2 + $0x118] sm:$0xff]
    %v824 = vld [vmem:[%s2 + $0x120] sm:$0xff]
    %v825 = vld [vmem:[%s2 + $0x128] sm:$0xff]
    %v826 = vld [vmem:[%s2 + $0x130] sm:$0xff]
    %v827 = vld [vmem:[%s2 + $0x138] sm:$0xff]
    %v828 = vld [vmem:[%s2 + $0x140] sm:$0xff]
    %v829 = vld [vmem:[%s2 + $0x148] sm:$0xff]
    %v830 = vld [vmem:[%s2 + $0x150] sm:$0xff]
    %v831 = vld [vmem:[%s2 + $0x158] sm:$0xff]
    %v832 = vld [vmem:[%s2 + $0x160] sm:$0xff]
    %v833 = vld [vmem:[%s2 + $0x168] sm:$0xff]
    %v834 = vld [vmem:[%s2 + $0x170] sm:$0xff]
    %v835 = vld [vmem:[%s2 + $0x178] sm:$0xff]
    %v836 = vld [vmem:[%s2 + $0x180] sm:$0xff]
    %v837 = vld [vmem:[%s2 + $0x188] sm:$0xff]
    %v838 = vld [vmem:[%s2 + $0x190] sm:$0xff]
    %v839 = vld [vmem:[%s2 + $0x198] sm:$0xff]
    %v840 = vld [vmem:[%s2 + $0x1a0] sm:$0xff]
    %v841 = vld [vmem:[%s2 + $0x1a8] sm:$0xff]
    %v842 = vld [vmem:[%s2 + $0x1b0] sm:$0xff]
    %v843 = vld [vmem:[%s2 + $0x1b8] sm:$0xff]
    %v844 = vld [vmem:[%s2 + $0x1c0] sm:$0xff]
    %v845 = vld [vmem:[%s2 + $0x1c8] sm:$0xff]
    %v846 = vld [vmem:[%s2 + $0x1d0] sm:$0xff]
    %v847 = vld [vmem:[%s2 + $0x1d8] sm:$0xff]
    %v848 = vld [vmem:[%s2 + $0x1e0] sm:$0xff]
    %v849 = vld [vmem:[%s2 + $0x1e8] sm:$0xff]
    %v850 = vld [vmem:[%s2 + $0x1f0] sm:$0xff]
    %v851 = vld [vmem:[%s2 + $0x1f8] sm:$0xff]
    %852 = vset.pattern.permute.xlu0 1
    %853 = vperm.xlu0 %852, %v18
    %v854 = vpop.permute.xlu0 %853
    %856 = vset.pattern.permute.xlu0 1
    %857 = vperm.xlu0 %856, %v19
    %v858 = vpop.permute.xlu0 %857
    %860 = vset.pattern.permute.xlu0 1
    %861 = vperm.xlu0 %860, %v20
    %v862 = vpop.permute.xlu0 %861
    %864 = vset.pattern.permute.xlu0 1
    %865 = vperm.xlu0 %864, %v21
    %v866 = vpop.permute.xlu0 %865
    %868 = vset.pattern.permute.xlu0 1
    %869 = vperm.xlu0 %868, %v22
    %v870 = vpop.permute.xlu0 %869
    %872 = vset.pattern.permute.xlu0 1
    %873 = vperm.xlu0 %872, %v23
    %v874 = vpop.permute.xlu0 %873
    %876 = vset.pattern.permute.xlu0 1
    %877 = vperm.xlu0 %876, %v24
    %v878 = vpop.permute.xlu0 %877
    %880 = vset.pattern.permute.xlu0 1
    %881 = vperm.xlu0 %880, %v25
    %v882 = vpop.permute.xlu0 %881
    %884 = vset.pattern.permute.xlu0 1
    %885 = vperm.xlu0 %884, %v26
    %v886 = vpop.permute.xlu0 %885
    %888 = vset.pattern.permute.xlu0 1
    %889 = vperm.xlu0 %888, %v27
    %v890 = vpop.permute.xlu0 %889
    %892 = vset.pattern.permute.xlu0 1
    %893 = vperm.xlu0 %892, %v28
    %v894 = vpop.permute.xlu0 %893
    %896 = vset.pattern.permute.xlu0 1
    %897 = vperm.xlu0 %896, %v29
    %v898 = vpop.permute.xlu0 %897
    %900 = vset.pattern.permute.xlu0 1
    %901 = vperm.xlu0 %900, %v30
    %v902 = vpop.permute.xlu0 %901
    %904 = vset.pattern.permute.xlu0 1
    %905 = vperm.xlu0 %904, %v31
    %v906 = vpop.permute.xlu0 %905
    %908 = vset.pattern.permute.xlu0 1
    %909 = vperm.xlu0 %908, %v32
    %v910 = vpop.permute.xlu0 %909
    %912 = vset.pattern.permute.xlu0 1
    %913 = vperm.xlu0 %912, %v33
    %v914 = vpop.permute.xlu0 %913
    %916 = vset.pattern.permute.xlu0 1
    %917 = vperm.xlu0 %916, %v34
    %v918 = vpop.permute.xlu0 %917
    %920 = vset.pattern.permute.xlu0 1
    %921 = vperm.xlu0 %920, %v35
    %v922 = vpop.permute.xlu0 %921
    %924 = vset.pattern.permute.xlu0 1
    %925 = vperm.xlu0 %924, %v36
    %v926 = vpop.permute.xlu0 %925
    %928 = vset.pattern.permute.xlu0 1
    %929 = vperm.xlu0 %928, %v37
    %v930 = vpop.permute.xlu0 %929
    %932 = vset.pattern.permute.xlu0 1
    %933 = vperm.xlu0 %932, %v38
    %v934 = vpop.permute.xlu0 %933
    %936 = vset.pattern.permute.xlu0 1
    %937 = vperm.xlu0 %936, %v39
    %v938 = vpop.permute.xlu0 %937
    %940 = vset.pattern.permute.xlu0 1
    %941 = vperm.xlu0 %940, %v40
    %v942 = vpop.permute.xlu0 %941
    %944 = vset.pattern.permute.xlu0 1
    %945 = vperm.xlu0 %944, %v41
    %v946 = vpop.permute.xlu0 %945
    %948 = vset.pattern.permute.xlu0 1
    %949 = vperm.xlu0 %948, %v42
    %v950 = vpop.permute.xlu0 %949
    %952 = vset.pattern.permute.xlu0 1
    %953 = vperm.xlu0 %952, %v43
    %v954 = vpop.permute.xlu0 %953
    %956 = vset.pattern.permute.xlu0 1
    %957 = vperm.xlu0 %956, %v44
    %v958 = vpop.permute.xlu0 %957
    %960 = vset.pattern.permute.xlu0 1
    %961 = vperm.xlu0 %960, %v45
    %v962 = vpop.permute.xlu0 %961
    %964 = vset.pattern.permute.xlu0 1
    %965 = vperm.xlu0 %964, %v46
    %v966 = vpop.permute.xlu0 %965
    %968 = vset.pattern.permute.xlu0 1
    %969 = vperm.xlu0 %968, %v47
    %v970 = vpop.permute.xlu0 %969
    %972 = vset.pattern.permute.xlu0 1
    %973 = vperm.xlu0 %972, %v48
    %v974 = vpop.permute.xlu0 %973
    %976 = vset.pattern.permute.xlu0 1
    %977 = vperm.xlu0 %976, %v49
    %v978 = vpop.permute.xlu0 %977
    %980 = vmatprep.subr.mxu0 %v725
    %981 = vmatpush1.msra.mxu0 %v724
    %982 = vmatprep.subr.mxu0 %v727
    %983 = vmatpush1.msra.mxu0 %v726
    %984 = vmatprep.subr.mxu0 %v729
    %985 = vmatpush1.msra.mxu0 %v728
    %986 = vmatprep.subr.mxu0 %v731
    %987 = vmatpush1.msra.mxu0 %v730
    %988 = vmatprep.subr.mxu0 %v733
    %989 = vmatpush1.msra.mxu0 %v732
    %990 = vmatprep.subr.mxu0 %v735
    %991 = vmatpush1.msra.mxu0 %v734
    %992 = vmatprep.subr.mxu0 %v737
    %993 = vmatpush1.msra.mxu0 %v736
    %994 = vmatprep.subr.mxu0 %v739
    %995 = vmatpush1.msra.mxu0 %v738
    %996 = vmatprep.subr.mxu0 %v741
    %997 = vmatpush1.msra.mxu0 %v740
    %998 = vmatprep.subr.mxu0 %v743
    %999 = vmatpush1.msra.mxu0 %v742
    %1000 = vmatprep.subr.mxu0 %v745
    %1001 = vmatpush1.msra.mxu0 %v744
    %1002 = vmatprep.subr.mxu0 %v747
    %1003 = vmatpush1.msra.mxu0 %v746
    %1004 = vmatprep.subr.mxu0 %v749
    %1005 = vmatpush1.msra.mxu0 %v748
    %1006 = vmatprep.subr.mxu0 %v751
    %1007 = vmatpush1.msra.mxu0 %v750
    %1008 = vmatprep.subr.mxu0 %v753
    %1009 = vmatpush1.msra.mxu0 %v752
    %1010 = vmatprep.subr.mxu0 %v755
    %1011 = vmatpush1.msra.mxu0 %v754
    %1012 = vmatprep.subr.mxu0 %v757
    %1013 = vmatpush1.msra.mxu0 %v756
    %1014 = vmatprep.subr.mxu0 %v759
    %1015 = vmatpush1.msra.mxu0 %v758
    %1016 = vmatprep.subr.mxu0 %v761
    %1017 = vmatpush1.msra.mxu0 %v760
    %1018 = vmatprep.subr.mxu0 %v763
    %1019 = vmatpush1.msra.mxu0 %v762
    %1020 = vmatprep.subr.mxu0 %v765
    %1021 = vmatpush1.msra.mxu0 %v764
    %1022 = vmatprep.subr.mxu0 %v767
    %1023 = vmatpush1.msra.mxu0 %v766
    %1024 = vmatprep.subr.mxu0 %v769
    %1025 = vmatpush1.msra.mxu0 %v768
    %1026 = vmatprep.subr.mxu0 %v771
    %1027 = vmatpush1.msra.mxu0 %v770
    %1028 = vmatprep.subr.mxu0 %v773
    %1029 = vmatpush1.msra.mxu0 %v772
    %1030 = vmatprep.subr.mxu0 %v775
    %1031 = vmatpush1.msra.mxu0 %v774
    %1032 = vmatprep.subr.mxu0 %v777
    %1033 = vmatpush1.msra.mxu0 %v776
    %1034 = vmatprep.subr.mxu0 %v779
    %1035 = vmatpush1.msra.mxu0 %v778
    %1036 = vmatprep.subr.mxu0 %v781
    %1037 = vmatpush1.msra.mxu0 %v780
    %1038 = vmatprep.subr.mxu0 %v783
    %1039 = vmatpush1.msra.mxu0 %v782
    %1040 = vmatprep.subr.mxu0 %v785
    %1041 = vmatpush1.msra.mxu0 %v784
    %1042 = vmatprep.subr.mxu0 %v787
    %1043 = vmatpush1.msra.mxu0 %v786
    %1044 = vmatprep.mubr.f32.mxu0 %v789
    %1045 = vmatmul.mubr.f32.gmra.mrb[0].mxu0 %v788
    %v1046 = vpop.f32.mrb[0].mxu0
    %v1047 = vadd.f32 %v854, %v1046
    %v1048 = vpop.f32.mrb[0].mxu0
    %v1049 = vadd.f32 %v854, %v1048
    %1050 = vmatprep.mubr.f32.mxu0 %v791
    %1051 = vmatmul.mubr.f32.gmra.mrb[0].mxu0 %v790
    %v1052 = vpop.f32.mrb[0].mxu0
    %v1053 = vadd.f32 %v858, %v1052
    %v1054 = vpop.f32.mrb[0].mxu0
    %v1055 = vadd.f32 %v858, %v1054
    %1056 = vmatprep.mubr.f32.mxu0 %v793
    %1057 = vmatmul.mubr.f32.gmra.mrb[0].mxu0 %v792
    %v1058 = vpop.f32.mrb[0].mxu0
    %v1059 = vadd.f32 %v862, %v1058
    %v1060 = vpop.f32.mrb[0].mxu0
    %v1061 = vadd.f32 %v862, %v1060
    %1062 = vmatprep.mubr.f32.mxu0 %v795
    %1063 = vmatmul.mubr.f32.gmra.mrb[0].mxu0 %v794
    %v1064 = vpop.f32.mrb[0].mxu0
    %v1065 = vadd.f32 %v866, %v1064
    %v1066 = vpop.f32.mrb[0].mxu0
    %v1067 = vadd.f32 %v866, %v1066
    %1068 = vmatprep.mubr.f32.mxu0 %v797
    %1069 = vmatmul.mubr.f32.gmra.mrb[0].mxu0 %v796
    %v1070 = vpop.f32.mrb[0].mxu0
    %v1071 = vadd.f32 %v870, %v1070
    %v1072 = vpop.f32.mrb[0].mxu0
    %v1073 = vadd.f32 %v870, %v1072
    %1074 = vmatprep.mubr.f32.mxu0 %v799
    %1075 = vmatmul.mubr.f32.gmra.mrb[0].mxu0 %v798
    %v1076 = vpop.f32.mrb[0].mxu0
    %v1077 = vadd.f32 %v874, %v1076
    %v1078 = vpop.f32.mrb[0].mxu0
    %v1079 = vadd.f32 %v874, %v1078
    %1080 = vmatprep.mubr.f32.mxu0 %v801
    %1081 = vmatmul.mubr.f32.gmra.mrb[0].mxu0 %v800
    %v1082 = vpop.f32.mrb[0].mxu0
    %v1083 = vadd.f32 %v878, %v1082
    %v1084 = vpop.f32.mrb[0].mxu0
    %v1085 = vadd.f32 %v878, %v1084
    %1086 = vmatprep.mubr.f32.mxu0 %v803
    %1087 = vmatmul.mubr.f32.gmra.mrb[0].mxu0 %v802
    %v1088 = vpop.f32.mrb[0].mxu0
    %v1089 = vadd.f32 %v882, %v1088
    %v1090 = vpop.f32.mrb[0].mxu0
    %v1091 = vadd.f32 %v882, %v1090
    %1092 = vmatprep.mubr.f32.mxu0 %v805
    %1093 = vmatmul.mubr.f32.gmra.mrb[0].mxu0 %v804
    %v1094 = vpop.f32.mrb[0].mxu0
    %v1095 = vadd.f32 %v886, %v1094
    %v1096 = vpop.f32.mrb[0].mxu0
    %v1097 = vadd.f32 %v886, %v1096
    %1098 = vmatprep.mubr.f32.mxu0 %v807
    %1099 = vmatmul.mubr.f32.gmra.mrb[0].mxu0 %v806
    %v1100 = vpop.f32.mrb[0].mxu0
    %v1101 = vadd.f32 %v890, %v1100
    %v1102 = vpop.f32.mrb[0].mxu0
    %v1103 = vadd.f32 %v890, %v1102
    %1104 = vmatprep.mubr.f32.mxu0 %v809
    %1105 = vmatmul.mubr.f32.gmra.mrb[0].mxu0 %v808
    %v1106 = vpop.f32.mrb[0].mxu0
    %v1107 = vadd.f32 %v894, %v1106
    %v1108 = vpop.f32.mrb[0].mxu0
    %v1109 = vadd.f32 %v894, %v1108
    %1110 = vmatprep.mubr.f32.mxu0 %v811
    %1111 = vmatmul.mubr.f32.gmra.mrb[0].mxu0 %v810
    %v1112 = vpop.f32.mrb[0].mxu0
    %v1113 = vadd.f32 %v898, %v1112
    %v1114 = vpop.f32.mrb[0].mxu0
    %v1115 = vadd.f32 %v898, %v1114
    %1116 = vmatprep.mubr.f32.mxu0 %v813
    %1117 = vmatmul.mubr.f32.gmra.mrb[0].mxu0 %v812
    %v1118 = vpop.f32.mrb[0].mxu0
    %v1119 = vadd.f32 %v902, %v1118
    %v1120 = vpop.f32.mrb[0].mxu0
    %v1121 = vadd.f32 %v902, %v1120
    %1122 = vmatprep.mubr.f32.mxu0 %v815
    %1123 = vmatmul.mubr.f32.gmra.mrb[0].mxu0 %v814
    %v1124 = vpop.f32.mrb[0].mxu0
    %v1125 = vadd.f32 %v906, %v1124
    %v1126 = vpop.f32.mrb[0].mxu0
    %v1127 = vadd.f32 %v906, %v1126
    %1128 = vmatprep.mubr.f32.mxu0 %v817
    %1129 = vmatmul.mubr.f32.gmra.mrb[0].mxu0 %v816
    %v1130 = vpop.f32.mrb[0].mxu0
    %v1131 = vadd.f32 %v910, %v1130
    %v1132 = vpop.f32.mrb[0].mxu0
    %v1133 = vadd.f32 %v910, %v1132
    %1134 = vmatprep.mubr.f32.mxu0 %v819
    %1135 = vmatmul.mubr.f32.gmra.mrb[0].mxu0 %v818
    %v1136 = vpop.f32.mrb[0].mxu0
    %v1137 = vadd.f32 %v914, %v1136
    %v1138 = vpop.f32.mrb[0].mxu0
    %v1139 = vadd.f32 %v914, %v1138
    %1140 = vmatprep.mubr.f32.mxu0 %v821
    %1141 = vmatmul.mubr.f32.gmra.mrb[0].mxu0 %v820
    %v1142 = vpop.f32.mrb[0].mxu0
    %v1143 = vadd.f32 %v918, %v1142
    %v1144 = vpop.f32.mrb[0].mxu0
    %v1145 = vadd.f32 %v918, %v1144
    %1146 = vmatprep.mubr.f32.mxu0 %v823
    %1147 = vmatmul.mubr.f32.gmra.mrb[0].mxu0 %v822
    %v1148 = vpop.f32.mrb[0].mxu0
    %v1149 = vadd.f32 %v922, %v1148
    %v1150 = vpop.f32.mrb[0].mxu0
    %v1151 = vadd.f32 %v922, %v1150
    %1152 = vmatprep.mubr.f32.mxu0 %v825
    %1153 = vmatmul.mubr.f32.gmra.mrb[0].mxu0 %v824
    %v1154 = vpop.f32.mrb[0].mxu0
    %v1155 = vadd.f32 %v926, %v1154
    %v1156 = vpop.f32.mrb[0].mxu0
    %v1157 = vadd.f32 %v926, %v1156
    %1158 = vmatprep.mubr.f32.mxu0 %v827
    %1159 = vmatmul.mubr.f32.gmra.mrb[0].mxu0 %v826
    %v1160 = vpop.f32.mrb[0].mxu0
    %v1161 = vadd.f32 %v930, %v1160
    %v1162 = vpop.f32.mrb[0].mxu0
    %v1163 = vadd.f32 %v930, %v1162
    %1164 = vmatprep.mubr.f32.mxu0 %v829
    %1165 = vmatmul.mubr.f32.gmra.mrb[0].mxu0 %v828
    %v1166 = vpop.f32.mrb[0].mxu0
    %v1167 = vadd.f32 %v934, %v1166
    %v1168 = vpop.f32.mrb[0].mxu0
    %v1169 = vadd.f32 %v934, %v1168
    %1170 = vmatprep.mubr.f32.mxu0 %v831
    %1171 = vmatmul.mubr.f32.gmra.mrb[0].mxu0 %v830
    %v1172 = vpop.f32.mrb[0].mxu0
    %v1173 = vadd.f32 %v938, %v1172
    %v1174 = vpop.f32.mrb[0].mxu0
    %v1175 = vadd.f32 %v938, %v1174
    %1176 = vmatprep.mubr.f32.mxu0 %v833
    %1177 = vmatmul.mubr.f32.gmra.mrb[0].mxu0 %v832
    %v1178 = vpop.f32.mrb[0].mxu0
    %v1179 = vadd.f32 %v942, %v1178
    %v1180 = vpop.f32.mrb[0].mxu0
    %v1181 = vadd.f32 %v942, %v1180
    %1182 = vmatprep.mubr.f32.mxu0 %v835
    %1183 = vmatmul.mubr.f32.gmra.mrb[0].mxu0 %v834
    %v1184 = vpop.f32.mrb[0].mxu0
    %v1185 = vadd.f32 %v946, %v1184
    %v1186 = vpop.f32.mrb[0].mxu0
    %v1187 = vadd.f32 %v946, %v1186
    %1188 = vmatprep.mubr.f32.mxu0 %v837
    %1189 = vmatmul.mubr.f32.gmra.mrb[0].mxu0 %v836
    %v1190 = vpop.f32.mrb[0].mxu0
    %v1191 = vadd.f32 %v950, %v1190
    %v1192 = vpop.f32.mrb[0].mxu0
    %v1193 = vadd.f32 %v950, %v1192
    %1194 = vmatprep.mubr.f32.mxu0 %v839
    %1195 = vmatmul.mubr.f32.gmra.mrb[0].mxu0 %v838
    %v1196 = vpop.f32.mrb[0].mxu0
    %v1197 = vadd.f32 %v954, %v1196
    %v1198 = vpop.f32.mrb[0].mxu0
    %v1199 = vadd.f32 %v954, %v1198
    %1200 = vmatprep.mubr.f32.mxu0 %v841
    %1201 = vmatmul.mubr.f32.gmra.mrb[0].mxu0 %v840
    %v1202 = vpop.f32.mrb[0].mxu0
    %v1203 = vadd.f32 %v958, %v1202
    %v1204 = vpop.f32.mrb[0].mxu0
    %v1205 = vadd.f32 %v958, %v1204
    %1206 = vmatprep.mubr.f32.mxu0 %v843
    %1207 = vmatmul.mubr.f32.gmra.mrb[0].mxu0 %v842
    %v1208 = vpop.f32.mrb[0].mxu0
    %v1209 = vadd.f32 %v962, %v1208
    %v1210 = vpop.f32.mrb[0].mxu0
    %v1211 = vadd.f32 %v962, %v1210
    %1212 = vmatprep.mubr.f32.mxu0 %v845
    %1213 = vmatmul.mubr.f32.gmra.mrb[0].mxu0 %v844
    %v1214 = vpop.f32.mrb[0].mxu0
    %v1215 = vadd.f32 %v966, %v1214
    %v1216 = vpop.f32.mrb[0].mxu0
    %v1217 = vadd.f32 %v966, %v1216
    %1218 = vmatprep.mubr.f32.mxu0 %v847
    %1219 = vmatmul.mubr.f32.gmra.mrb[0].mxu0 %v846
    %v1220 = vpop.f32.mrb[0].mxu0
    %v1221 = vadd.f32 %v970, %v1220
    %v1222 = vpop.f32.mrb[0].mxu0
    %v1223 = vadd.f32 %v970, %v1222
    %1224 = vmatprep.mubr.f32.mxu0 %v849
    %1225 = vmatmul.mubr.f32.gmra.mrb[0].mxu0 %v848
    %v1226 = vpop.f32.mrb[0].mxu0
    %v1227 = vadd.f32 %v974, %v1226
    %v1228 = vpop.f32.mrb[0].mxu0
    %v1229 = vadd.f32 %v974, %v1228
    %1230 = vmatprep.mubr.f32.mxu0 %v851
    %1231 = vmatmul.mubr.f32.gmra.mrb[0].mxu0 %v850
    %v1232 = vpop.f32.mrb[0].mxu0
    %v1233 = vadd.f32 %v978, %v1232
    %v1234 = vpop.f32.mrb[0].mxu0
    %v1235 = vadd.f32 %v978, %v1234
    %1236 = vdwg.mxu0
    %v1237 = vmax.f32 %v1047, 0.0
    %v1238 = vmax.f32 %v1049, 0.0
    %v1239 = vmax.f32 %v1053, 0.0
    %v1240 = vmax.f32 %v1055, 0.0
    %v1241 = vmax.f32 %v1059, 0.0
    %v1242 = vmax.f32 %v1061, 0.0
    %v1243 = vmax.f32 %v1065, 0.0
    %v1244 = vmax.f32 %v1067, 0.0
    %v1245 = vmax.f32 %v1071, 0.0
    %v1246 = vmax.f32 %v1073, 0.0
    %v1247 = vmax.f32 %v1077, 0.0
    %v1248 = vmax.f32 %v1079, 0.0
    %v1249 = vmax.f32 %v1083, 0.0
    %v1250 = vmax.f32 %v1085, 0.0
    %v1251 = vmax.f32 %v1089, 0.0
    %v1252 = vmax.f32 %v1091, 0.0
    %v1253 = vmax.f32 %v1095, 0.0
    %v1254 = vmax.f32 %v1097, 0.0
    %v1255 = vmax.f32 %v1101, 0.0
    %v1256 = vmax.f32 %v1103, 0.0
    %v1257 = vmax.f32 %v1107, 0.0
    %v1258 = vmax.f32 %v1109, 0.0
    %v1259 = vmax.f32 %v1113, 0.0
    %v1260 = vmax.f32 %v1115, 0.0
    %v1261 = vmax.f32 %v1119, 0.0
    %v1262 = vmax.f32 %v1121, 0.0
    %v1263 = vmax.f32 %v1125, 0.0
    %v1264 = vmax.f32 %v1127, 0.0
    %v1265 = vmax.f32 %v1131, 0.0
    %v1266 = vmax.f32 %v1133, 0.0
    %v1267 = vmax.f32 %v1137, 0.0
    %v1268 = vmax.f32 %v1139, 0.0
    %v1269 = vmax.f32 %v1143, 0.0
    %v1270 = vmax.f32 %v1145, 0.0
    %v1271 = vmax.f32 %v1149, 0.0
    %v1272 = vmax.f32 %v1151, 0.0
    %v1273 = vmax.f32 %v1155, 0.0
    %v1274 = vmax.f32 %v1157, 0.0
    %v1275 = vmax.f32 %v1161, 0.0
    %v1276 = vmax.f32 %v1163, 0.0
    %v1277 = vmax.f32 %v1167, 0.0
    %v1278 = vmax.f32 %v1169, 0.0
    %v1279 = vmax.f32 %v1173, 0.0
    %v1280 = vmax.f32 %v1175, 0.0
    %v1281 = vmax.f32 %v1179, 0.0
    %v1282 = vmax.f32 %v1181, 0.0
    %v1283 = vmax.f32 %v1185, 0.0
    %v1284 = vmax.f32 %v1187, 0.0
    %v1285 = vmax.f32 %v1191, 0.0
    %v1286 = vmax.f32 %v1193, 0.0
    %v1287 = vmax.f32 %v1197, 0.0
    %v1288 = vmax.f32 %v1199, 0.0
    %v1289 = vmax.f32 %v1203, 0.0
    %v1290 = vmax.f32 %v1205, 0.0
    %v1291 = vmax.f32 %v1209, 0.0
    %v1292 = vmax.f32 %v1211, 0.0
    %v1293 = vmax.f32 %v1215, 0.0
    %v1294 = vmax.f32 %v1217, 0.0
    %v1295 = vmax.f32 %v1221, 0.0
    %v1296 = vmax.f32 %v1223, 0.0
    %v1297 = vmax.f32 %v1227, 0.0
    %v1298 = vmax.f32 %v1229, 0.0
    %v1299 = vmax.f32 %v1233, 0.0
    %v1300 = vmax.f32 %v1235, 0.0
    %1301 = vset.pattern.permute.xlu0 2
    %1302 = vperm.xlu0 %1301, %v18
    %v1303 = vpop.permute.xlu0 %1302
    %1305 = vset.pattern.permute.xlu0 2
    %1306 = vperm.xlu0 %1305, %v19
    %v1307 = vpop.permute.xlu0 %1306
    %1309 = vset.pattern.permute.xlu0 2
    %1310 = vperm.xlu0 %1309, %v20
    %v1311 = vpop.permute.xlu0 %1310
    %1313 = vset.pattern.permute.xlu0 2
    %1314 = vperm.xlu0 %1313, %v21
    %v1315 = vpop.permute.xlu0 %1314
    %1317 = vset.pattern.permute.xlu0 2
    %1318 = vperm.xlu0 %1317, %v22
    %v1319 = vpop.permute.xlu0 %1318
    %1321 = vset.pattern.permute.xlu0 2
    %1322 = vperm.xlu0 %1321, %v23
    %v1323 = vpop.permute.xlu0 %1322
    %1325 = vset.pattern.permute.xlu0 2
    %1326 = vperm.xlu0 %1325, %v24
    %v1327 = vpop.permute.xlu0 %1326
    %1329 = vset.pattern.permute.xlu0 2
    %1330 = vperm.xlu0 %1329, %v25
    %v1331 = vpop.permute.xlu0 %1330
    %1333 = vset.pattern.permute.xlu0 2
    %1334 = vperm.xlu0 %1333, %v26
    %v1335 = vpop.permute.xlu0 %1334
    %1337 = vset.pattern.permute.xlu0 2
    %1338 = vperm.xlu0 %1337, %v27
    %v1339 = vpop.permute.xlu0 %1338
    %1341 = vset.pattern.permute.xlu0 2
    %1342 = vperm.xlu0 %1341, %v28
    %v1343 = vpop.permute.xlu0 %1342
    %1345 = vset.pattern.permute.xlu0 2
    %1346 = vperm.xlu0 %1345, %v29
    %v1347 = vpop.permute.xlu0 %1346
    %1349 = vset.pattern.permute.xlu0 2
    %1350 = vperm.xlu0 %1349, %v30
    %v1351 = vpop.permute.xlu0 %1350
    %1353 = vset.pattern.permute.xlu0 2
    %1354 = vperm.xlu0 %1353, %v31
    %v1355 = vpop.permute.xlu0 %1354
    %1357 = vset.pattern.permute.xlu0 2
    %1358 = vperm.xlu0 %1357, %v32
    %v1359 = vpop.permute.xlu0 %1358
    %1361 = vset.pattern.permute.xlu0 2
    %1362 = vperm.xlu0 %1361, %v33
    %v1363 = vpop.permute.xlu0 %1362
    %1365 = vset.pattern.permute.xlu0 2
    %1366 = vperm.xlu0 %1365, %v34
    %v1367 = vpop.permute.xlu0 %1366
    %1369 = vset.pattern.permute.xlu0 2
    %1370 = vperm.xlu0 %1369, %v35
    %v1371 = vpop.permute.xlu0 %1370
    %1373 = vset.pattern.permute.xlu0 2
    %1374 = vperm.xlu0 %1373, %v36
    %v1375 = vpop.permute.xlu0 %1374
    %1377 = vset.pattern.permute.xlu0 2
    %1378 = vperm.xlu0 %1377, %v37
    %v1379 = vpop.permute.xlu0 %1378
    %1381 = vset.pattern.permute.xlu0 2
    %1382 = vperm.xlu0 %1381, %v38
    %v1383 = vpop.permute.xlu0 %1382
    %1385 = vset.pattern.permute.xlu0 2
    %1386 = vperm.xlu0 %1385, %v39
    %v1387 = vpop.permute.xlu0 %1386
    %1389 = vset.pattern.permute.xlu0 2
    %1390 = vperm.xlu0 %1389, %v40
    %v1391 = vpop.permute.xlu0 %1390
    %1393 = vset.pattern.permute.xlu0 2
    %1394 = vperm.xlu0 %1393, %v41
    %v1395 = vpop.permute.xlu0 %1394
    %1397 = vset.pattern.permute.xlu0 2
    %1398 = vperm.xlu0 %1397, %v42
    %v1399 = vpop.permute.xlu0 %1398
    %1401 = vset.pattern.permute.xlu0 2
    %1402 = vperm.xlu0 %1401, %v43
    %v1403 = vpop.permute.xlu0 %1402
    %1405 = vset.pattern.permute.xlu0 2
    %1406 = vperm.xlu0 %1405, %v44
    %v1407 = vpop.permute.xlu0 %1406
    %1409 = vset.pattern.permute.xlu0 2
    %1410 = vperm.xlu0 %1409, %v45
    %v1411 = vpop.permute.xlu0 %1410
    %1413 = vset.pattern.permute.xlu0 2
    %1414 = vperm.xlu0 %1413, %v46
    %v1415 = vpop.permute.xlu0 %1414
    %1417 = vset.pattern.permute.xlu0 2
    %1418 = vperm.xlu0 %1417, %v47
    %v1419 = vpop.permute.xlu0 %1418
    %1421 = vset.pattern.permute.xlu0 2
    %1422 = vperm.xlu0 %1421, %v48
    %v1423 = vpop.permute.xlu0 %1422
    %1425 = vset.pattern.permute.xlu0 2
    %1426 = vperm.xlu0 %1425, %v49
    %v1427 = vpop.permute.xlu0 %1426
    %v1429 = vmul.f32 %v1237, %v1303
    %v1430 = vmul.f32 %v1238, %v1303
    %v1431 = vmul.f32 %v1239, %v1307
    %v1432 = vmul.f32 %v1240, %v1307
    %v1433 = vmul.f32 %v1241, %v1311
    %v1434 = vmul.f32 %v1242, %v1311
    %v1435 = vmul.f32 %v1243, %v1315
    %v1436 = vmul.f32 %v1244, %v1315
    %v1437 = vmul.f32 %v1245, %v1319
    %v1438 = vmul.f32 %v1246, %v1319
    %v1439 = vmul.f32 %v1247, %v1323
    %v1440 = vmul.f32 %v1248, %v1323
    %v1441 = vmul.f32 %v1249, %v1327
    %v1442 = vmul.f32 %v1250, %v1327
    %v1443 = vmul.f32 %v1251, %v1331
    %v1444 = vmul.f32 %v1252, %v1331
    %v1445 = vmul.f32 %v1253, %v1335
    %v1446 = vmul.f32 %v1254, %v1335
    %v1447 = vmul.f32 %v1255, %v1339
    %v1448 = vmul.f32 %v1256, %v1339
    %v1449 = vmul.f32 %v1257, %v1343
    %v1450 = vmul.f32 %v1258, %v1343
    %v1451 = vmul.f32 %v1259, %v1347
    %v1452 = vmul.f32 %v1260, %v1347
    %v1453 = vmul.f32 %v1261, %v1351
    %v1454 = vmul.f32 %v1262, %v1351
    %v1455 = vmul.f32 %v1263, %v1355
    %v1456 = vmul.f32 %v1264, %v1355
    %v1457 = vmul.f32 %v1265, %v1359
    %v1458 = vmul.f32 %v1266, %v1359
    %v1459 = vmul.f32 %v1267, %v1363
    %v1460 = vmul.f32 %v1268, %v1363
    %v1461 = vmul.f32 %v1269, %v1367
    %v1462 = vmul.f32 %v1270, %v1367
    %v1463 = vmul.f32 %v1271, %v1371
    %v1464 = vmul.f32 %v1272, %v1371
    %v1465 = vmul.f32 %v1273, %v1375
    %v1466 = vmul.f32 %v1274, %v1375
    %v1467 = vmul.f32 %v1275, %v1379
    %v1468 = vmul.f32 %v1276, %v1379
    %v1469 = vmul.f32 %v1277, %v1383
    %v1470 = vmul.f32 %v1278, %v1383
    %v1471 = vmul.f32 %v1279, %v1387
    %v1472 = vmul.f32 %v1280, %v1387
    %v1473 = vmul.f32 %v1281, %v1391
    %v1474 = vmul.f32 %v1282, %v1391
    %v1475 = vmul.f32 %v1283, %v1395
    %v1476 = vmul.f32 %v1284, %v1395
    %v1477 = vmul.f32 %v1285, %v1399
    %v1478 = vmul.f32 %v1286, %v1399
    %v1479 = vmul.f32 %v1287, %v1403
    %v1480 = vmul.f32 %v1288, %v1403
    %v1481 = vmul.f32 %v1289, %v1407
    %v1482 = vmul.f32 %v1290, %v1407
    %v1483 = vmul.f32 %v1291, %v1411
    %v1484 = vmul.f32 %v1292, %v1411
    %v1485 = vmul.f32 %v1293, %v1415
    %v1486 = vmul.f32 %v1294, %v1415
    %v1487 = vmul.f32 %v1295, %v1419
    %v1488 = vmul.f32 %v1296, %v1419
    %v1489 = vmul.f32 %v1297, %v1423
    %v1490 = vmul.f32 %v1298, %v1423
    %v1491 = vmul.f32 %v1299, %v1427
    %v1492 = vmul.f32 %v1300, %v1427
    %v1493 = vadd.f32 %v1429, %v1431
    %v1494 = vadd.f32 %v1493, %v1433
    %v1495 = vadd.f32 %v1494, %v1435
    %v1496 = vadd.f32 %v1495, %v1437
    %v1497 = vadd.f32 %v1496, %v1439
    %v1498 = vadd.f32 %v1497, %v1441
    %v1499 = vadd.f32 %v1498, %v1443
    %v1500 = vadd.f32 %v1499, %v1445
    %v1501 = vadd.f32 %v1500, %v1447
    %v1502 = vadd.f32 %v1501, %v1449
    %v1503 = vadd.f32 %v1502, %v1451
    %v1504 = vadd.f32 %v1503, %v1453
    %v1505 = vadd.f32 %v1504, %v1455
    %v1506 = vadd.f32 %v1505, %v1457
    %v1507 = vadd.f32 %v1506, %v1459
    %v1508 = vadd.f32 %v1507, %v1461
    %v1509 = vadd.f32 %v1508, %v1463
    %v1510 = vadd.f32 %v1509, %v1465
    %v1511 = vadd.f32 %v1510, %v1467
    %v1512 = vadd.f32 %v1511, %v1469
    %v1513 = vadd.f32 %v1512, %v1471
    %v1514 = vadd.f32 %v1513, %v1473
    %v1515 = vadd.f32 %v1514, %v1475
    %v1516 = vadd.f32 %v1515, %v1477
    %v1517 = vadd.f32 %v1516, %v1479
    %v1518 = vadd.f32 %v1517, %v1481
    %v1519 = vadd.f32 %v1518, %v1483
    %v1520 = vadd.f32 %v1519, %v1485
    %v1521 = vadd.f32 %v1520, %v1487
    %v1522 = vadd.f32 %v1521, %v1489
    %v1523 = vadd.f32 %v1522, %v1491
    %v1524 = vrot.slane %v1523, 4
    %v1525 = vadd.f32 %v1523, %v1524
    %v1526 = vrot.slane %v1525, 2
    %v1527 = vadd.f32 %v1525, %v1526
    %v1528 = vrot.slane %v1527, 1
    %v1529 = vadd.f32 %v1527, %v1528
    %v1530 = vadd.f32 %v1430, %v1432
    %v1531 = vadd.f32 %v1530, %v1434
    %v1532 = vadd.f32 %v1531, %v1436
    %v1533 = vadd.f32 %v1532, %v1438
    %v1534 = vadd.f32 %v1533, %v1440
    %v1535 = vadd.f32 %v1534, %v1442
    %v1536 = vadd.f32 %v1535, %v1444
    %v1537 = vadd.f32 %v1536, %v1446
    %v1538 = vadd.f32 %v1537, %v1448
    %v1539 = vadd.f32 %v1538, %v1450
    %v1540 = vadd.f32 %v1539, %v1452
    %v1541 = vadd.f32 %v1540, %v1454
    %v1542 = vadd.f32 %v1541, %v1456
    %v1543 = vadd.f32 %v1542, %v1458
    %v1544 = vadd.f32 %v1543, %v1460
    %v1545 = vadd.f32 %v1544, %v1462
    %v1546 = vadd.f32 %v1545, %v1464
    %v1547 = vadd.f32 %v1546, %v1466
    %v1548 = vadd.f32 %v1547, %v1468
    %v1549 = vadd.f32 %v1548, %v1470
    %v1550 = vadd.f32 %v1549, %v1472
    %v1551 = vadd.f32 %v1550, %v1474
    %v1552 = vadd.f32 %v1551, %v1476
    %v1553 = vadd.f32 %v1552, %v1478
    %v1554 = vadd.f32 %v1553, %v1480
    %v1555 = vadd.f32 %v1554, %v1482
    %v1556 = vadd.f32 %v1555, %v1484
    %v1557 = vadd.f32 %v1556, %v1486
    %v1558 = vadd.f32 %v1557, %v1488
    %v1559 = vadd.f32 %v1558, %v1490
    %v1560 = vadd.f32 %v1559, %v1492
    %v1561 = vrot.slane %v1560, 4
    %v1562 = vadd.f32 %v1560, %v1561
    %v1563 = vrot.slane %v1562, 2
    %v1564 = vadd.f32 %v1562, %v1563
    %v1565 = vrot.slane %v1564, 1
    %v1566 = vadd.f32 %v1564, %v1565
    %1567 = vset.pattern.permute.xlu0 3
    %1568 = vperm.xlu0 %1567, %v18
    %v1569 = vpop.permute.xlu0 %1568
    %v1571 = vadd.f32 %v1529, %v1569
    %v1572 = vadd.f32 %v1566, %v1569
    %v1575 = vcombine.low %v1571, %v1572
    %v1577 = vunpack.c.l.s4 1966171168
    %v1578 = vunpack.c.0.s8 %v1577
    %v1579 = vlaneseq
    %v1580 = vshrl.u32 %v1579, 7
    %v1581 = vsub.s32 %v1578, %v1580
    %v1582 = vrot.slane %v1575, %v1581
    %v1584 = vunpack.c.l.s4 1966171168
    %v1585 = vunpack.c.0.s8 %v1584
    %v1586 = vlaneseq
    %v1587 = vshrl.u32 %v1586, 7
    %v1588 = vsub.s32 %v1585, %v1587
    %v1589 = vrot.slane %v1582, %v1588
    %v1591 = vlaneseq
    %vm1592 = vcmp.ge.s32.totalorder %v1591, 0
    %vm1593 = vcmp.lt.s32.totalorder %v1591, 256
    %vm1594 = vmand %vm1592, %vm1593
    %1595 = vst.msk [vmem:[#allocation2] sm:$0x3] %vm1594, %v1589
    // Predicated region
    $region18: #{tpu_custom_call.1} parent=1 // pred_check
      _
    $region19: #{tpu_custom_call.1} parent=1 // pred_check_branch
      %1597 = sbr.rel (0) target = $region21
    $region20: #{tpu_custom_call.1} parent=1 // pred_region
      %s1599 = ssub.s32 32, 32
      %1600 = vsyncadd [#allocation3], %s1599
      %s1602 = sshll.u32 [#allocation2], 4
      %s1603 = int_to_ptr.vmem [resolvable:$true] %s1602
      %1605 = dma.vmem_to_hbm [thread:$0]  %s1603, 32, %s4, [#allocation3]
    $region21: #{tpu_custom_call.1} parent=1 // pred_fallthru
      _
    // Predicated region
    $region22: #{tpu_custom_call.1} parent=1 // pred_check
      _
    $region23: #{tpu_custom_call.1} parent=1 // pred_check_branch
      %1607 = sbr.rel (0) target = $region25
    $region24: #{tpu_custom_call.1} parent=1 // pred_region
      %1608 = dma.done [#allocation3], 32
    $region25: #{tpu_custom_call.1} parent=1 // pred_fallthru
      _
    %1609 = vsyncpa [#allocation3], 1

</llo_original>
